<compile_context>
chip_gen: v7x
topology: tpu7x:2x2x1
jax: 0.10.0
libtpu: 0.0.40
codegen_flags: <defaults>
</compile_context>

<pallas_src>
import functools

import jax
import jax.numpy as jnp
from jax.experimental import pallas as pl
from jax.experimental.pallas import tpu as pltpu

_BN_EPS = 1e-5


# ----------------------------- Pallas kernel -------------------------------

def _mlp_kernel(x_ref, lat_ref,
                w1_ref,
                w2_ref, b2_ref,
                wl_ref, bl_ref,
                wo_ref, bo_ref,
                o_ref, *, num_layers):
    """One grid step = one (batch, lane-tile) of points. Weights are VMEM-resident.

    x_ref:   (3, T)              input points, channel-major (T points in lanes)
    lat_ref: (bottleneck, 1)     per-batch latent with bn1 scale + layer-1 bias folded in
    w1_ref:  (3, bottleneck, 1)  layer-1 weight columns (BN folded in)
    w*_ref:  (C_out, C_in)       BN-folded weights; b*_ref: (C_out, 1)
    """
    x = x_ref[...]                                    # (3, T)

    # ---- layer 1: K=3 contraction as three VPU FMAs (skip the MXU) --------
    h = (w1_ref[0] * x[0:1, :]
         + w1_ref[1] * x[1:2, :]
         + w1_ref[2] * x[2:3, :])                     # (bottleneck, T)
    # latent column broadcasts over lanes; bias/shift already folded into it.
    h = jnp.maximum(h + lat_ref[...], 0.0)

    mm_dtype = w2_ref.dtype                           # bf16 (default) or f32

    # ---- layer 2 -----------------------------------------------------------
    h = jnp.dot(w2_ref[...], h.astype(mm_dtype),
                preferred_element_type=jnp.float32) + b2_ref[...]
    h = jnp.maximum(h, 0.0)

    # ---- hidden conv_list layers (static unroll) ---------------------------
    for i in range(num_layers):
        h = jnp.dot(wl_ref[i], h.astype(mm_dtype),
                    preferred_element_type=jnp.float32) + bl_ref[i]
        h = jnp.maximum(h, 0.0)

    # ---- last_conv (no bn, no activation): lane-dense (3, T) store ---------
    o_ref[...] = (jnp.dot(wo_ref[...], h.astype(mm_dtype),
                          preferred_element_type=jnp.float32)
                  + bo_ref[...]).astype(o_ref.dtype)


def _pick_tile(n_pad, batch, width):
    """Largest 128-multiple lane tile that divides n_pad, VMEM-capped by layer width,
    shrunk if needed so the parallel grid has >= 2 steps (v7x two-TC sharding)."""
    # Keep each (width, tile) f32 intermediate <= ~4 MiB (safe on v7x's 64 MiB VMEM).
    cap = max(128, min(8192, (4 * 1024 * 1024 // (max(width, 8) * 4)) // 128 * 128))
    tile = 128
    for t in (8192, 4096, 2048, 1024, 512, 256, 128):
        if t <= cap and t <= n_pad and n_pad % t == 0:
            tile = t
            break
    while batch * (n_pad // tile) < 2 and tile > 128:
        tile //= 2
    return tile


def mapping3d_forward(x_ncw, latent, folded, *, num_layers,
                      matmul_dtype=jnp.bfloat16):
    """x_ncw: (B, 3, N) PyTorch NCW; latent: (B, bottleneck). Returns (B, 3, N)."""
    B, C_in, N = x_ncw.shape
    assert C_in == 3
    hidden, bottleneck = folded["w2"].shape

    # Pad N to a multiple of 128 (unmasked lane-dense stores); sliced off at the end.
    N_pad = ((N + 127) // 128) * 128
    if N_pad != N:
        x_ncw = jnp.pad(x_ncw, ((0, 0), (0, 0), (0, N_pad - N)))
    tile = _pick_tile(N_pad, B, max(bottleneck, hidden))
    n_tiles = N_pad // tile

    # Per-batch latent column: lat' = s1*(latent + conv1.b) + t1  -> (B, bottleneck, 1)
    lat = (latent * folded["s1_row"][None, :] + folded["b1_row"][None, :])[:, :, None]

    w_cast = lambda w: w.astype(matmul_dtype)
    in_arrays = (
        x_ncw, lat,
        folded["w1_cols"],                            # layer 1 stays on the VPU (f32)
        w_cast(folded["w2"]), folded["b2"],
        w_cast(folded["wl"]), folded["bl"],
        w_cast(folded["wo"]), folded["bo"],
    )

    # NCW access: batch axis squeezed, (3, tile) lane-dense block per grid step.
    point_spec = pl.BlockSpec((pl.Squeezed(), 3, tile), lambda b, i: (b, 0, i))
    lat_spec = pl.BlockSpec((pl.Squeezed(), bottleneck, 1), lambda b, i: (b, 0, 0))

    def _full_spec(shape):
        zeros = (0,) * len(shape)
        return pl.BlockSpec(shape, lambda b, i, _z=zeros: _z)

    in_specs = ([point_spec, lat_spec]
                + [_full_spec(a.shape) for a in in_arrays[2:]])

    kernel = functools.partial(_mlp_kernel, num_layers=num_layers)
    out = pl.pallas_call(
        kernel,
        out_shape=jax.ShapeDtypeStruct((B, 3, N_pad), jnp.float32),
        grid_spec=pltpu.PrefetchScalarGridSpec(
            num_scalar_prefetch=0,
            grid=(B, n_tiles),
            in_specs=in_specs,
            out_specs=point_spec,
        ),
        compiler_params=pltpu.CompilerParams(
            dimension_semantics=("parallel", "parallel")),
    )(*in_arrays)

    if N_pad != N:
        out = out[:, :, :N]
    return out                                        # (B, 3, N), NCW — no transposes


# ------------------------- parameters (raw + folded) ------------------------

def make_raw_params(key, bottleneck, hidden, num_layers):
    """PyTorch-layout params: conv weight (C_out, C_in), bias (C_out,), BN running stats."""
    keys = iter(jax.random.split(key, 64))
    nk = lambda: next(keys)

    def conv(c_in, c_out):
        return {"w": 0.2 * jax.random.normal(nk(), (c_out, c_in), jnp.float32),
                "b": 0.1 * jax.random.normal(nk(), (c_out,), jnp.float32)}

    def bn(c):
        return {"gamma": 1.0 + 0.1 * jax.random.normal(nk(), (c,), jnp.float32),
                "beta": 0.1 * jax.random.normal(nk(), (c,), jnp.float32),
                "mean": 0.1 * jax.random.normal(nk(), (c,), jnp.float32),
                "var": jnp.abs(1.0 + 0.1 * jax.random.normal(nk(), (c,), jnp.float32))}

    return {
        "conv1": conv(3, bottleneck), "bn1": bn(bottleneck),
        "conv2": conv(bottleneck, hidden), "bn2": bn(hidden),
        "conv_list": [conv(hidden, hidden) for _ in range(num_layers)],
        "bn_list": [bn(hidden) for _ in range(num_layers)],
        "last_conv": conv(hidden, 3),
    }


def fold_params(raw):
    """Fold eval-mode BatchNorm into conv weights/biases; layer-1 bias folds into latent."""
    def bn_scale_shift(bn):
        s = bn["gamma"] / jnp.sqrt(bn["var"] + _BN_EPS)
        return s, bn["beta"] - bn["mean"] * s

    def fold_conv(conv, s, t):
        w = conv["w"] * s[:, None]                    # (C_out, C_in)
        b = (conv["b"] * s + t)[:, None]              # (C_out, 1)
        return w, b

    s1, t1 = bn_scale_shift(raw["bn1"])
    s2, t2 = bn_scale_shift(raw["bn2"])
    w1 = raw["conv1"]["w"] * s1[:, None]              # (bottleneck, 3)
    b1_row = raw["conv1"]["b"] * s1 + t1              # (bottleneck,) -> folded into latent
    w2, b2 = fold_conv(raw["conv2"], s2, t2)

    wl, bl = [], []
    for conv, bn in zip(raw["conv_list"], raw["bn_list"]):
        s, t = bn_scale_shift(bn)
        w, b = fold_conv(conv, s, t)
        wl.append(w)
        bl.append(b)

    return {
        # layer-1 weight as 3 column vectors (3, bottleneck, 1) for the VPU FMA path
        "w1_cols": jnp.transpose(w1)[:, :, None],
        "b1_row": b1_row,
        "s1_row": s1,                                 # also scales the latent
        "w2": w2, "b2": b2,
        "wl": jnp.stack(wl), "bl": jnp.stack(bl),
        "wo": raw["last_conv"]["w"],
        "bo": raw["last_conv"]["b"][:, None],
    }


# ----------------------------- JAX reference --------------------------------

def reference_forward(x_ncw, latent, raw, *, num_layers):
    """Eval-mode PyTorch-equivalent forward using the raw (unfolded) parameters."""
    hp = jax.lax.Precision.HIGHEST

    def conv1x1(h, conv):                             # h: (B, N, C_in)
        return jnp.einsum("bnc,oc->bno", h, conv["w"], precision=hp) + conv["b"]

    def bn_eval(h, bn):
        return (h - bn["mean"]) / jnp.sqrt(bn["var"] + _BN_EPS) * bn["gamma"] + bn["beta"]

    x = jnp.transpose(x_ncw, (0, 2, 1))               # (B, N, 3)
    h = conv1x1(x, raw["conv1"]) + latent[:, None, :]
    h = jnp.maximum(bn_eval(h, raw["bn1"]), 0.0)
    h = jnp.maximum(bn_eval(conv1x1(h, raw["conv2"]), raw["bn2"]), 0.0)
    for i in range(num_layers):
        h = jnp.maximum(bn_eval(conv1x1(h, raw["conv_list"][i]), raw["bn_list"][i]), 0.0)
    out = conv1x1(h, raw["last_conv"])
    return jnp.transpose(out, (0, 2, 1))              # (B, 3, N)


# --------------------------------- main -------------------------------------

if __name__ == "__main__":
    B, N = 2, 128
    bottleneck = 32          # opt.style_bottleneck_size
    hidden = 32              # opt.hidden_neurons
    num_layers = 2           # opt.num_layers == opt.num_layers_style
    # activation: 'relu'; BatchNorm in eval mode (running stats folded into weights).

    key = jax.random.PRNGKey(0)
    kx, klat, kp = jax.random.split(key, 3)
    x = jax.random.normal(kx, (B, 3, N), jnp.float32)          # PyTorch NCW input
    latent = jax.random.normal(klat, (B, bottleneck), jnp.float32)

    raw = make_raw_params(kp, bottleneck, hidden, num_layers)
    folded = fold_params(raw)

    ref = reference_forward(x, latent, raw, num_layers=num_layers)

    # f32 MXU operands: exact PyTorch-f32-equivalent semantics.
    out_f32 = mapping3d_forward(x, latent, folded, num_layers=num_layers,
                                matmul_dtype=jnp.float32)
    out_f32 = jax.block_until_ready(out_f32)
    assert out_f32.shape == (B, 3, N)
    assert jnp.allclose(out_f32, ref, atol=1e-4, rtol=1e-4), "f32 mismatch vs reference"

    # Default bf16 MXU operands (f32 accumulation): perf headroom on v5e/v6e/v7x.
    out_bf16 = jax.block_until_ready(
        mapping3d_forward(x, latent, folded, num_layers=num_layers))
    assert out_bf16.shape == (B, 3, N)
    assert jnp.allclose(out_bf16, ref, atol=1e-1, rtol=1e-1), "bf16 mismatch vs reference"

    print("KERNEL_OK")
</pallas_src>

<mosaic_0001>
module attributes {stable_mosaic.version = 11 : i64} {
  func.func @_mlp_kernel(%arg0: i32, %arg1: i32, %arg2: memref<1x3x128xf32, #tpu.memory_space<vmem>>, %arg3: memref<1x32x1xf32, #tpu.memory_space<vmem>>, %arg4: memref<3x32x1xf32, #tpu.memory_space<vmem>>, %arg5: memref<32x32xf32, #tpu.memory_space<vmem>>, %arg6: memref<32x1xf32, #tpu.memory_space<vmem>>, %arg7: memref<2x32x32xf32, #tpu.memory_space<vmem>>, %arg8: memref<2x32x1xf32, #tpu.memory_space<vmem>>, %arg9: memref<3x32xf32, #tpu.memory_space<vmem>>, %arg10: memref<3x1xf32, #tpu.memory_space<vmem>>, %arg11: memref<1x3x128xf32, #tpu.memory_space<vmem>>) attributes {dimension_semantics = [#tpu.dimension_semantics<parallel>, #tpu.dimension_semantics<parallel>], iteration_bounds = array<i64: 2, 1>, scalar_prefetch = 0 : i64, scratch_operands = 0 : i64, tpu.core_type = #tpu.core_type<tc>, window_params = [{transform_indices = @transform_0, window_bounds = array<i64: 1, 3, 128>}, {transform_indices = @transform_1, window_bounds = array<i64: 1, 32, 1>}, {pipeline_mode = #tpu.pipeline_mode<synchronous>, transform_indices = @transform_2, window_bounds = array<i64: 3, 32, 1>}, {pipeline_mode = #tpu.pipeline_mode<synchronous>, transform_indices = @transform_3, window_bounds = array<i64: 32, 32>}, {pipeline_mode = #tpu.pipeline_mode<synchronous>, transform_indices = @transform_4, window_bounds = array<i64: 32, 1>}, {pipeline_mode = #tpu.pipeline_mode<synchronous>, transform_indices = @transform_5, window_bounds = array<i64: 2, 32, 32>}, {pipeline_mode = #tpu.pipeline_mode<synchronous>, transform_indices = @transform_6, window_bounds = array<i64: 2, 32, 1>}, {pipeline_mode = #tpu.pipeline_mode<synchronous>, transform_indices = @transform_7, window_bounds = array<i64: 3, 32>}, {pipeline_mode = #tpu.pipeline_mode<synchronous>, transform_indices = @transform_8, window_bounds = array<i64: 3, 1>}, {transform_indices = @transform_9, window_bounds = array<i64: 1, 3, 128>}]} {
    %c0 = arith.constant 0 : index
    %c0_0 = arith.constant 0 : index
    %c0_1 = arith.constant 0 : index
    %0 = vector.load %arg2[%c0, %c0_0, %c0_1] : memref<1x3x128xf32, #tpu.memory_space<vmem>>, vector<1x3x128xf32>
    %1 = vector.shape_cast %0 : vector<1x3x128xf32> to vector<3x128xf32>
    %c0_2 = arith.constant 0 : index
    %c0_3 = arith.constant 0 : index
    %c0_4 = arith.constant 0 : index
    %2 = vector.load %arg4[%c0_2, %c0_3, %c0_4] : memref<3x32x1xf32, #tpu.memory_space<vmem>>, vector<1x32x1xf32>
    %3 = vector.shape_cast %2 : vector<1x32x1xf32> to vector<32x1xf32>
    %4 = vector.extract_strided_slice %1 {offsets = [0, 0], sizes = [1, 128], strides = [1, 1]} : vector<3x128xf32> to vector<1x128xf32>
    %5 = vector.broadcast %3 : vector<32x1xf32> to vector<32x128xf32>
    %6 = vector.broadcast %4 : vector<1x128xf32> to vector<32x128xf32>
    %7 = arith.mulf %5, %6 : vector<32x128xf32>
    %c1 = arith.constant 1 : index
    %c0_5 = arith.constant 0 : index
    %c0_6 = arith.constant 0 : index
    %8 = vector.load %arg4[%c1, %c0_5, %c0_6] : memref<3x32x1xf32, #tpu.memory_space<vmem>>, vector<1x32x1xf32>
    %9 = vector.shape_cast %8 : vector<1x32x1xf32> to vector<32x1xf32>
    %10 = vector.extract_strided_slice %1 {offsets = [1, 0], sizes = [1, 128], strides = [1, 1]} : vector<3x128xf32> to vector<1x128xf32>
    %11 = vector.broadcast %9 : vector<32x1xf32> to vector<32x128xf32>
    %12 = vector.broadcast %10 : vector<1x128xf32> to vector<32x128xf32>
    %13 = arith.mulf %11, %12 : vector<32x128xf32>
    %14 = arith.addf %7, %13 : vector<32x128xf32>
    %c2 = arith.constant 2 : index
    %c0_7 = arith.constant 0 : index
    %c0_8 = arith.constant 0 : index
    %15 = vector.load %arg4[%c2, %c0_7, %c0_8] : memref<3x32x1xf32, #tpu.memory_space<vmem>>, vector<1x32x1xf32>
    %16 = vector.shape_cast %15 : vector<1x32x1xf32> to vector<32x1xf32>
    %17 = vector.extract_strided_slice %1 {offsets = [2, 0], sizes = [1, 128], strides = [1, 1]} : vector<3x128xf32> to vector<1x128xf32>
    %18 = vector.broadcast %16 : vector<32x1xf32> to vector<32x128xf32>
    %19 = vector.broadcast %17 : vector<1x128xf32> to vector<32x128xf32>
    %20 = arith.mulf %18, %19 : vector<32x128xf32>
    %21 = arith.addf %14, %20 : vector<32x128xf32>
    %c0_9 = arith.constant 0 : index
    %c0_10 = arith.constant 0 : index
    %c0_11 = arith.constant 0 : index
    %22 = vector.load %arg3[%c0_9, %c0_10, %c0_11] : memref<1x32x1xf32, #tpu.memory_space<vmem>>, vector<1x32x1xf32>
    %23 = vector.shape_cast %22 : vector<1x32x1xf32> to vector<32x1xf32>
    %24 = vector.broadcast %23 : vector<32x1xf32> to vector<32x128xf32>
    %25 = arith.addf %21, %24 : vector<32x128xf32>
    %cst = arith.constant 0.000000e+00 : f32
    %26 = vector.broadcast %cst : f32 to vector<32x128xf32>
    %27 = arith.maximumf %25, %26 : vector<32x128xf32>
    %c0_12 = arith.constant 0 : index
    %c0_13 = arith.constant 0 : index
    %28 = vector.load %arg5[%c0_12, %c0_13] : memref<32x32xf32, #tpu.memory_space<vmem>>, vector<32x32xf32>
    %cst_14 = arith.constant dense<0.000000e+00> : vector<32x128xf32>
    %29 = tpu.matmul %28, %27, %cst_14 {dimension_numbers = #tpu.dot_dimension_numbers<[1], [0], [0], [1], [0, 0, 1, 1], [], []>} : vector<32x32xf32>, vector<32x128xf32>, vector<32x128xf32> -> vector<32x128xf32>
    %c0_15 = arith.constant 0 : index
    %c0_16 = arith.constant 0 : index
    %30 = vector.load %arg6[%c0_15, %c0_16] : memref<32x1xf32, #tpu.memory_space<vmem>>, vector<32x1xf32>
    %31 = vector.broadcast %30 : vector<32x1xf32> to vector<32x128xf32>
    %32 = arith.addf %29, %31 : vector<32x128xf32>
    %cst_17 = arith.constant 0.000000e+00 : f32
    %33 = vector.broadcast %cst_17 : f32 to vector<32x128xf32>
    %34 = arith.maximumf %32, %33 : vector<32x128xf32>
    %c0_18 = arith.constant 0 : index
    %c0_19 = arith.constant 0 : index
    %c0_20 = arith.constant 0 : index
    %35 = vector.load %arg7[%c0_18, %c0_19, %c0_20] : memref<2x32x32xf32, #tpu.memory_space<vmem>>, vector<1x32x32xf32>
    %36 = vector.shape_cast %35 : vector<1x32x32xf32> to vector<32x32xf32>
    %cst_21 = arith.constant dense<0.000000e+00> : vector<32x128xf32>
    %37 = tpu.matmul %36, %34, %cst_21 {dimension_numbers = #tpu.dot_dimension_numbers<[1], [0], [0], [1], [0, 0, 1, 1], [], []>} : vector<32x32xf32>, vector<32x128xf32>, vector<32x128xf32> -> vector<32x128xf32>
    %c0_22 = arith.constant 0 : index
    %c0_23 = arith.constant 0 : index
    %c0_24 = arith.constant 0 : index
    %38 = vector.load %arg8[%c0_22, %c0_23, %c0_24] : memref<2x32x1xf32, #tpu.memory_space<vmem>>, vector<1x32x1xf32>
    %39 = vector.shape_cast %38 : vector<1x32x1xf32> to vector<32x1xf32>
    %40 = vector.broadcast %39 : vector<32x1xf32> to vector<32x128xf32>
    %41 = arith.addf %37, %40 : vector<32x128xf32>
    %cst_25 = arith.constant 0.000000e+00 : f32
    %42 = vector.broadcast %cst_25 : f32 to vector<32x128xf32>
    %43 = arith.maximumf %41, %42 : vector<32x128xf32>
    %c1_26 = arith.constant 1 : index
    %c0_27 = arith.constant 0 : index
    %c0_28 = arith.constant 0 : index
    %44 = vector.load %arg7[%c1_26, %c0_27, %c0_28] : memref<2x32x32xf32, #tpu.memory_space<vmem>>, vector<1x32x32xf32>
    %45 = vector.shape_cast %44 : vector<1x32x32xf32> to vector<32x32xf32>
    %cst_29 = arith.constant dense<0.000000e+00> : vector<32x128xf32>
    %46 = tpu.matmul %45, %43, %cst_29 {dimension_numbers = #tpu.dot_dimension_numbers<[1], [0], [0], [1], [0, 0, 1, 1], [], []>} : vector<32x32xf32>, vector<32x128xf32>, vector<32x128xf32> -> vector<32x128xf32>
    %c1_30 = arith.constant 1 : index
    %c0_31 = arith.constant 0 : index
    %c0_32 = arith.constant 0 : index
    %47 = vector.load %arg8[%c1_30, %c0_31, %c0_32] : memref<2x32x1xf32, #tpu.memory_space<vmem>>, vector<1x32x1xf32>
    %48 = vector.shape_cast %47 : vector<1x32x1xf32> to vector<32x1xf32>
    %49 = vector.broadcast %48 : vector<32x1xf32> to vector<32x128xf32>
    %50 = arith.addf %46, %49 : vector<32x128xf32>
    %cst_33 = arith.constant 0.000000e+00 : f32
    %51 = vector.broadcast %cst_33 : f32 to vector<32x128xf32>
    %52 = arith.maximumf %50, %51 : vector<32x128xf32>
    %c0_34 = arith.constant 0 : index
    %c0_35 = arith.constant 0 : index
    %53 = vector.load %arg9[%c0_34, %c0_35] : memref<3x32xf32, #tpu.memory_space<vmem>>, vector<3x32xf32>
    %cst_36 = arith.constant dense<0.000000e+00> : vector<3x128xf32>
    %54 = tpu.matmul %53, %52, %cst_36 {dimension_numbers = #tpu.dot_dimension_numbers<[1], [0], [0], [1], [0, 0, 1, 1], [], []>} : vector<3x32xf32>, vector<32x128xf32>, vector<3x128xf32> -> vector<3x128xf32>
    %c0_37 = arith.constant 0 : index
    %c0_38 = arith.constant 0 : index
    %55 = vector.load %arg10[%c0_37, %c0_38] : memref<3x1xf32, #tpu.memory_space<vmem>>, vector<3x1xf32>
    %56 = vector.broadcast %55 : vector<3x1xf32> to vector<3x128xf32>
    %57 = arith.addf %54, %56 : vector<3x128xf32>
    %c0_39 = arith.constant 0 : index
    %c0_40 = arith.constant 0 : index
    %c0_41 = arith.constant 0 : index
    %58 = vector.load %arg11[%c0_39, %c0_40, %c0_41] : memref<1x3x128xf32, #tpu.memory_space<vmem>>, vector<1x3x128xf32>
    %59 = vector.shape_cast %58 : vector<1x3x128xf32> to vector<3x128xf32>
    %60 = vector.shape_cast %57 : vector<3x128xf32> to vector<1x3x128xf32>
    tpu.vector_store %arg11[%c0_39, %c0_40, %c0_41], %60 {strides = array<i32>} : memref<1x3x128xf32, #tpu.memory_space<vmem>>, vector<1x3x128xf32>,
    return
  }
  func.func @transform_0(%arg0: i32, %arg1: i32) -> (i32, i32, i32) {
    %c0_i32 = arith.constant 0 : i32
    %c0_i32_0 = arith.constant 0 : i32
    return %arg0, %c0_i32, %arg1 : i32, i32, i32
  }
  func.func @transform_1(%arg0: i32, %arg1: i32) -> (i32, i32, i32) {
    %c0_i32 = arith.constant 0 : i32
    %c0_i32_0 = arith.constant 0 : i32
    %c0_i32_1 = arith.constant 0 : i32
    return %arg0, %c0_i32, %c0_i32_0 : i32, i32, i32
  }
  func.func @transform_2(%arg0: i32, %arg1: i32) -> (i32, i32, i32) {
    %c0_i32 = arith.constant 0 : i32
    %c0_i32_0 = arith.constant 0 : i32
    %c0_i32_1 = arith.constant 0 : i32
    %c0_i32_2 = arith.constant 0 : i32
    return %c0_i32, %c0_i32_0, %c0_i32_1 : i32, i32, i32
  }
  func.func @transform_3(%arg0: i32, %arg1: i32) -> (i32, i32) {
    %c0_i32 = arith.constant 0 : i32
    %c0_i32_0 = arith.constant 0 : i32
    %c0_i32_1 = arith.constant 0 : i32
    return %c0_i32, %c0_i32_0 : i32, i32
  }
  func.func @transform_4(%arg0: i32, %arg1: i32) -> (i32, i32) {
    %c0_i32 = arith.constant 0 : i32
    %c0_i32_0 = arith.constant 0 : i32
    %c0_i32_1 = arith.constant 0 : i32
    return %c0_i32, %c0_i32_0 : i32, i32
  }
  func.func @transform_5(%arg0: i32, %arg1: i32) -> (i32, i32, i32) {
    %c0_i32 = arith.constant 0 : i32
    %c0_i32_0 = arith.constant 0 : i32
    %c0_i32_1 = arith.constant 0 : i32
    %c0_i32_2 = arith.constant 0 : i32
    return %c0_i32, %c0_i32_0, %c0_i32_1 : i32, i32, i32
  }
  func.func @transform_6(%arg0: i32, %arg1: i32) -> (i32, i32, i32) {
    %c0_i32 = arith.constant 0 : i32
    %c0_i32_0 = arith.constant 0 : i32
    %c0_i32_1 = arith.constant 0 : i32
    %c0_i32_2 = arith.constant 0 : i32
    return %c0_i32, %c0_i32_0, %c0_i32_1 : i32, i32, i32
  }
  func.func @transform_7(%arg0: i32, %arg1: i32) -> (i32, i32) {
    %c0_i32 = arith.constant 0 : i32
    %c0_i32_0 = arith.constant 0 : i32
    %c0_i32_1 = arith.constant 0 : i32
    return %c0_i32, %c0_i32_0 : i32, i32
  }
  func.func @transform_8(%arg0: i32, %arg1: i32) -> (i32, i32) {
    %c0_i32 = arith.constant 0 : i32
    %c0_i32_0 = arith.constant 0 : i32
    %c0_i32_1 = arith.constant 0 : i32
    return %c0_i32, %c0_i32_0 : i32, i32
  }
  func.func @transform_9(%arg0: i32, %arg1: i32) -> (i32, i32, i32) {
    %c0_i32 = arith.constant 0 : i32
    %c0_i32_0 = arith.constant 0 : i32
    return %arg0, %c0_i32, %arg1 : i32, i32, i32
  }
}

</mosaic_0001>

<llo_original>
// kernel: tpu_custom_call.1
$region0: #{tpu_custom_call.1}
  #allocation0 [shape = 'u32[]', space=smem, size = 0x4, offset = 0x4, fixed_abs, tag = 'smem constant byte address 0x4 - core index']
  #allocation1 [shape = 'u32[144,128]{1,0:T(1,128)}', space=vmem, size = 0x12000, scoped, tag = 'internal scratch']
  %s0 = inlined_call_operand.vmem [shape: f32[2,3,128], index: 0, kind: input, shape index: {}]
  %s1 = inlined_call_operand.vmem [shape: f32[2,32,1], index: 1, kind: input, shape index: {}]
  %s2 = inlined_call_operand.vmem [shape: f32[3,32,1], index: 2, kind: input, shape index: {}]
  %s3 = inlined_call_operand.vmem [shape: f32[32,32], index: 3, kind: input, shape index: {}]
  %s4 = inlined_call_operand.vmem [shape: f32[32,1], index: 4, kind: input, shape index: {}]
  %s5 = inlined_call_operand.vmem [shape: f32[2,32,32], index: 5, kind: input, shape index: {}]
  %s6 = inlined_call_operand.vmem [shape: f32[2,32,1], index: 6, kind: input, shape index: {}]
  %s7 = inlined_call_operand.vmem [shape: f32[3,32], index: 7, kind: input, shape index: {}]
  %s8 = inlined_call_operand.vmem [shape: f32[3,1], index: 8, kind: input, shape index: {}]
  %s9 = inlined_call_operand.vmem [shape: f32[2,3,128], index: 9, kind: output, shape index: {}]
  %s10 = sld [smem:[#allocation0]]
  $region69: #{tpu_custom_call.1} parent=0
    _
  %s12 = ssub.s32 1, %s10
  %s13 = scalar_select 0, %s12, %s10
  loop: start=0, step=1, limit=4
  $region2: #{tpu_custom_call.1} parent=0 // loop_pre_header
    _
  $region3: #{tpu_custom_call.1} parent=0 // loop_header
    %s15 = sphi 0, %s19
    %p16 = scmp.ge.s32.totalorder %s15, 4
    %s22 = sphi 0, %s34
    %s23 = sphi 0, %s30
    %s24 = sphi 0, %s22
    %s25 = sphi 0, %s23
    %s26 = sphi 0, %s24
    %s27 = sphi 0, %s25
    %s39 = sphi 0, %s41
    %s42 = sphi 0, %s39
    %s43 = sphi 0, %s42
    %s59 = sphi 0, %s43
    %s65 = sphi 0, %s67
    %s68 = sphi 0, %s65
    %s69 = sphi 0, %s68
    %s85 = sphi 0, %s69
    %s89 = sphi 0, %s89
    %s91 = sphi 0, %s89
    %s92 = sphi 0, %s91
    %s106 = sphi 0, %s92
    %s110 = sphi 0, %s110
    %s112 = sphi 0, %s110
    %s113 = sphi 0, %s112
    %s127 = sphi 0, %s113
    %s131 = sphi 0, %s131
    %s133 = sphi 0, %s131
    %s134 = sphi 0, %s133
    %s148 = sphi 0, %s134
    %s152 = sphi 0, %s152
    %s154 = sphi 0, %s152
    %s155 = sphi 0, %s154
    %s169 = sphi 0, %s155
    %s173 = sphi 0, %s173
    %s175 = sphi 0, %s173
    %s176 = sphi 0, %s175
    %s190 = sphi 0, %s176
    %s194 = sphi 0, %s194
    %s196 = sphi 0, %s194
    %s197 = sphi 0, %s196
    %s211 = sphi 0, %s197
    %s215 = sphi 0, %s215
    %s217 = sphi 0, %s215
    %s218 = sphi 0, %s217
    %s232 = sphi 0, %s218
    %s240 = sphi 0, %s242
    %s243 = sphi 0, %s240
    %s244 = sphi 0, %s243
    %s260 = sphi 0, %s244
  $region4: #{tpu_custom_call.1} parent=0 // loop_header_branch
    %18 = sbr.rel (%p16) target = $region8
  $region5: #{tpu_custom_call.1} parent=0 // loop_body
    %s20 = ssub.s32 %s15, 1
    %s21 = ssub.s32 %s15, 2
    %s28 = sadd.s32 1, %s23
    %p29 = scmp.ge.s32.totalorder %s28, 1
    %s30 = scalar_select %p29, 0, %s28
    %s31 = sadd.s32 1, %s22
    %s32 = scalar_select %p29, %s31, %s22
    %p33 = scmp.ge.s32.totalorder %s32, 2
    %s34 = scalar_select %p33, 0, %s32
    %s35 = ssub.s32 %s22, %s34
    %s36 = ssub.s32 %s23, %s30
    %s37 = sor.u32 %s35, %s36
    %p38 = scmp.eq.s32.totalorder %s37, 0
    %s40 = sadd.s32 %s39, 1
    %s41 = scalar_select %p38, %s39, %s40
    %p44 = pneg %p38
    %p45 = scmp.eq.s32.totalorder %s15, 1
    %p46 = por %p44, %p45
    %p47 = scmp.ne.s32.totalorder %s39, %s42
    %p48 = scmp.eq.s32.totalorder %s15, 0
    %p49 = por %p47, %p48
    %p50 = scmp.ne.s32.totalorder %s39, %s42
    %p51 = scmp.eq.s32.totalorder %s20, 1
    %p52 = por %p50, %p51
    %p53 = scmp.ne.s32.totalorder %s42, %s43
    %p54 = scmp.eq.s32.totalorder %s20, 0
    %p55 = por %p53, %p54
    %p56 = scmp.ne.s32.totalorder %s42, %s43
    %p57 = scmp.eq.s32.totalorder %s21, 1
    %p58 = por %p56, %p57
    %p60 = scmp.ne.s32.totalorder %s43, %s59
    %p61 = scmp.eq.s32.totalorder %s21, 0
    %p62 = por %p60, %p61
    %s63 = ssub.s32 %s22, %s34
    %p64 = scmp.eq.s32.totalorder %s63, 0
    %s66 = sadd.s32 %s65, 1
    %s67 = scalar_select %p64, %s65, %s66
    %p70 = pneg %p64
    %p71 = scmp.eq.s32.totalorder %s15, 1
    %p72 = por %p70, %p71
    %p73 = scmp.ne.s32.totalorder %s65, %s68
    %p74 = scmp.eq.s32.totalorder %s15, 0
    %p75 = por %p73, %p74
    %p76 = scmp.ne.s32.totalorder %s65, %s68
    %p77 = scmp.eq.s32.totalorder %s20, 1
    %p78 = por %p76, %p77
    %p79 = scmp.ne.s32.totalorder %s68, %s69
    %p80 = scmp.eq.s32.totalorder %s20, 0
    %p81 = por %p79, %p80
    %p82 = scmp.ne.s32.totalorder %s68, %s69
    %p83 = scmp.eq.s32.totalorder %s21, 1
    %p84 = por %p82, %p83
    %p86 = scmp.ne.s32.totalorder %s69, %s85
    %p87 = scmp.eq.s32.totalorder %s21, 0
    %p88 = por %p86, %p87
    %s90 = sadd.s32 %s89, 1
    %p93 = scmp.eq.s32.totalorder %s15, 1
    %p94 = scmp.ne.s32.totalorder %s89, %s91
    %p95 = scmp.eq.s32.totalorder %s15, 0
    %p96 = por %p94, %p95
    %p97 = scmp.ne.s32.totalorder %s89, %s91
    %p98 = scmp.eq.s32.totalorder %s20, 1
    %p99 = por %p97, %p98
    %p100 = scmp.ne.s32.totalorder %s91, %s92
    %p101 = scmp.eq.s32.totalorder %s20, 0
    %p102 = por %p100, %p101
    %p103 = scmp.ne.s32.totalorder %s91, %s92
    %p104 = scmp.eq.s32.totalorder %s21, 1
    %p105 = por %p103, %p104
    %p107 = scmp.ne.s32.totalorder %s92, %s106
    %p108 = scmp.eq.s32.totalorder %s21, 0
    %p109 = por %p107, %p108
    %s111 = sadd.s32 %s110, 1
    %p114 = scmp.eq.s32.totalorder %s15, 1
    %p115 = scmp.ne.s32.totalorder %s110, %s112
    %p116 = scmp.eq.s32.totalorder %s15, 0
    %p117 = por %p115, %p116
    %p118 = scmp.ne.s32.totalorder %s110, %s112
    %p119 = scmp.eq.s32.totalorder %s20, 1
    %p120 = por %p118, %p119
    %p121 = scmp.ne.s32.totalorder %s112, %s113
    %p122 = scmp.eq.s32.totalorder %s20, 0
    %p123 = por %p121, %p122
    %p124 = scmp.ne.s32.totalorder %s112, %s113
    %p125 = scmp.eq.s32.totalorder %s21, 1
    %p126 = por %p124, %p125
    %p128 = scmp.ne.s32.totalorder %s113, %s127
    %p129 = scmp.eq.s32.totalorder %s21, 0
    %p130 = por %p128, %p129
    %s132 = sadd.s32 %s131, 1
    %p135 = scmp.eq.s32.totalorder %s15, 1
    %p136 = scmp.ne.s32.totalorder %s131, %s133
    %p137 = scmp.eq.s32.totalorder %s15, 0
    %p138 = por %p136, %p137
    %p139 = scmp.ne.s32.totalorder %s131, %s133
    %p140 = scmp.eq.s32.totalorder %s20, 1
    %p141 = por %p139, %p140
    %p142 = scmp.ne.s32.totalorder %s133, %s134
    %p143 = scmp.eq.s32.totalorder %s20, 0
    %p144 = por %p142, %p143
    %p145 = scmp.ne.s32.totalorder %s133, %s134
    %p146 = scmp.eq.s32.totalorder %s21, 1
    %p147 = por %p145, %p146
    %p149 = scmp.ne.s32.totalorder %s134, %s148
    %p150 = scmp.eq.s32.totalorder %s21, 0
    %p151 = por %p149, %p150
    %s153 = sadd.s32 %s152, 1
    %p156 = scmp.eq.s32.totalorder %s15, 1
    %p157 = scmp.ne.s32.totalorder %s152, %s154
    %p158 = scmp.eq.s32.totalorder %s15, 0
    %p159 = por %p157, %p158
    %p160 = scmp.ne.s32.totalorder %s152, %s154
    %p161 = scmp.eq.s32.totalorder %s20, 1
    %p162 = por %p160, %p161
    %p163 = scmp.ne.s32.totalorder %s154, %s155
    %p164 = scmp.eq.s32.totalorder %s20, 0
    %p165 = por %p163, %p164
    %p166 = scmp.ne.s32.totalorder %s154, %s155
    %p167 = scmp.eq.s32.totalorder %s21, 1
    %p168 = por %p166, %p167
    %p170 = scmp.ne.s32.totalorder %s155, %s169
    %p171 = scmp.eq.s32.totalorder %s21, 0
    %p172 = por %p170, %p171
    %s174 = sadd.s32 %s173, 1
    %p177 = scmp.eq.s32.totalorder %s15, 1
    %p178 = scmp.ne.s32.totalorder %s173, %s175
    %p179 = scmp.eq.s32.totalorder %s15, 0
    %p180 = por %p178, %p179
    %p181 = scmp.ne.s32.totalorder %s173, %s175
    %p182 = scmp.eq.s32.totalorder %s20, 1
    %p183 = por %p181, %p182
    %p184 = scmp.ne.s32.totalorder %s175, %s176
    %p185 = scmp.eq.s32.totalorder %s20, 0
    %p186 = por %p184, %p185
    %p187 = scmp.ne.s32.totalorder %s175, %s176
    %p188 = scmp.eq.s32.totalorder %s21, 1
    %p189 = por %p187, %p188
    %p191 = scmp.ne.s32.totalorder %s176, %s190
    %p192 = scmp.eq.s32.totalorder %s21, 0
    %p193 = por %p191, %p192
    %s195 = sadd.s32 %s194, 1
    %p198 = scmp.eq.s32.totalorder %s15, 1
    %p199 = scmp.ne.s32.totalorder %s194, %s196
    %p200 = scmp.eq.s32.totalorder %s15, 0
    %p201 = por %p199, %p200
    %p202 = scmp.ne.s32.totalorder %s194, %s196
    %p203 = scmp.eq.s32.totalorder %s20, 1
    %p204 = por %p202, %p203
    %p205 = scmp.ne.s32.totalorder %s196, %s197
    %p206 = scmp.eq.s32.totalorder %s20, 0
    %p207 = por %p205, %p206
    %p208 = scmp.ne.s32.totalorder %s196, %s197
    %p209 = scmp.eq.s32.totalorder %s21, 1
    %p210 = por %p208, %p209
    %p212 = scmp.ne.s32.totalorder %s197, %s211
    %p213 = scmp.eq.s32.totalorder %s21, 0
    %p214 = por %p212, %p213
    %s216 = sadd.s32 %s215, 1
    %p219 = scmp.eq.s32.totalorder %s15, 1
    %p220 = scmp.ne.s32.totalorder %s215, %s217
    %p221 = scmp.eq.s32.totalorder %s15, 0
    %p222 = por %p220, %p221
    %p223 = scmp.ne.s32.totalorder %s215, %s217
    %p224 = scmp.eq.s32.totalorder %s20, 1
    %p225 = por %p223, %p224
    %p226 = scmp.ne.s32.totalorder %s217, %s218
    %p227 = scmp.eq.s32.totalorder %s20, 0
    %p228 = por %p226, %p227
    %p229 = scmp.ne.s32.totalorder %s217, %s218
    %p230 = scmp.eq.s32.totalorder %s21, 1
    %p231 = por %p229, %p230
    %p233 = scmp.ne.s32.totalorder %s218, %s232
    %p234 = scmp.eq.s32.totalorder %s21, 0
    %p235 = por %p233, %p234
    %s236 = ssub.s32 %s22, %s34
    %s237 = ssub.s32 %s23, %s30
    %s238 = sor.u32 %s236, %s237
    %p239 = scmp.eq.s32.totalorder %s238, 0
    %s241 = sadd.s32 %s240, 1
    %s242 = scalar_select %p239, %s240, %s241
    %p245 = pneg %p239
    %p246 = scmp.eq.s32.totalorder %s15, 1
    %p247 = por %p245, %p246
    %p248 = scmp.ne.s32.totalorder %s240, %s243
    %p249 = scmp.eq.s32.totalorder %s15, 0
    %p250 = por %p248, %p249
    %p251 = scmp.ne.s32.totalorder %s240, %s243
    %p252 = scmp.eq.s32.totalorder %s20, 1
    %p253 = por %p251, %p252
    %p254 = scmp.ne.s32.totalorder %s243, %s244
    %p255 = scmp.eq.s32.totalorder %s20, 0
    %p256 = por %p254, %p255
    %p257 = scmp.ne.s32.totalorder %s243, %s244
    %p258 = scmp.eq.s32.totalorder %s21, 1
    %p259 = por %p257, %p258
    %p261 = scmp.ne.s32.totalorder %s244, %s260
    %p262 = scmp.eq.s32.totalorder %s21, 0
    %p263 = por %p261, %p262
    %p264 = scmp.le.s32.totalorder 1, %s15
    %p265 = scmp.lt.s32.totalorder %s15, 3
    %p266 = pnand %p264, %p265
    %p267 = pneg %p266
    // Predicated region
    $region9: #{tpu_custom_call.1} parent=5 // pred_check
      _
    $region10: #{tpu_custom_call.1} parent=5 // pred_check_branch
      %269 = sbr.rel (%p266) target = $region12
    $region11: #{tpu_custom_call.1} parent=5 // pred_region
      %s270 = ssub.s32 %s15, 1
      // Predicated region
      $region13: #{tpu_custom_call.1} parent=11 // pred_check
        %p271 = pneg %p102
      $region14: #{tpu_custom_call.1} parent=11 // pred_check_branch
        %273 = sbr.rel (%p271) target = $region16
      $region15: #{tpu_custom_call.1} parent=11 // pred_region
        _
      $region16: #{tpu_custom_call.1} parent=11 // pred_fallthru
        _
      // Predicated region
      $region17: #{tpu_custom_call.1} parent=11 // pred_check
        %p274 = pneg %p123
      $region18: #{tpu_custom_call.1} parent=11 // pred_check_branch
        %276 = sbr.rel (%p274) target = $region20
      $region19: #{tpu_custom_call.1} parent=11 // pred_region
        _
      $region20: #{tpu_custom_call.1} parent=11 // pred_fallthru
        _
      // Predicated region
      $region21: #{tpu_custom_call.1} parent=11 // pred_check
        %p277 = pneg %p144
      $region22: #{tpu_custom_call.1} parent=11 // pred_check_branch
        %279 = sbr.rel (%p277) target = $region24
      $region23: #{tpu_custom_call.1} parent=11 // pred_region
        _
      $region24: #{tpu_custom_call.1} parent=11 // pred_fallthru
        _
      // Predicated region
      $region25: #{tpu_custom_call.1} parent=11 // pred_check
        %p280 = pneg %p165
      $region26: #{tpu_custom_call.1} parent=11 // pred_check_branch
        %282 = sbr.rel (%p280) target = $region28
      $region27: #{tpu_custom_call.1} parent=11 // pred_region
        _
      $region28: #{tpu_custom_call.1} parent=11 // pred_fallthru
        _
      // Predicated region
      $region29: #{tpu_custom_call.1} parent=11 // pred_check
        %p283 = pneg %p186
      $region30: #{tpu_custom_call.1} parent=11 // pred_check_branch
        %285 = sbr.rel (%p283) target = $region32
      $region31: #{tpu_custom_call.1} parent=11 // pred_region
        _
      $region32: #{tpu_custom_call.1} parent=11 // pred_fallthru
        _
      // Predicated region
      $region33: #{tpu_custom_call.1} parent=11 // pred_check
        %p286 = pneg %p207
      $region34: #{tpu_custom_call.1} parent=11 // pred_check_branch
        %288 = sbr.rel (%p286) target = $region36
      $region35: #{tpu_custom_call.1} parent=11 // pred_region
        _
      $region36: #{tpu_custom_call.1} parent=11 // pred_fallthru
        _
      // Predicated region
      $region37: #{tpu_custom_call.1} parent=11 // pred_check
        %p289 = pneg %p228
      $region38: #{tpu_custom_call.1} parent=11 // pred_check_branch
        %291 = sbr.rel (%p289) target = $region40
      $region39: #{tpu_custom_call.1} parent=11 // pred_region
        _
      $region40: #{tpu_custom_call.1} parent=11 // pred_fallthru
        _
    $region12: #{tpu_custom_call.1} parent=5 // pred_fallthru
      _
    %p292 = scmp.lt.s32.totalorder %s15, 2
    // Predicated region
    $region41: #{tpu_custom_call.1} parent=5 // pred_check
      %p293 = pneg %p292
    $region42: #{tpu_custom_call.1} parent=5 // pred_check_branch
      %295 = sbr.rel (%p293) target = $region44
    $region43: #{tpu_custom_call.1} parent=5 // pred_region
      // Predicated region
      $region45: #{tpu_custom_call.1} parent=43 // pred_check
        %p296 = pneg %p49
      $region46: #{tpu_custom_call.1} parent=43 // pred_check_branch
        %298 = sbr.rel (%p296) target = $region48
      $region47: #{tpu_custom_call.1} parent=43 // pred_region
        %p299 = scmp.lt.s32.totalorder %s22, 1
        %s300 = scalar_select %p299, %s22, 1
        %p301 = scmp.lt.s32.totalorder %s23, 0
        %s302 = scalar_select %p301, %s23, 0
        %s303 = sadd.s32 %s302, %s300
        %s304 = smul.addr %s303, 4
        %s305 = scalar_lea.vmem %s0, %s304
      $region48: #{tpu_custom_call.1} parent=43 // pred_fallthru
        _
      // Predicated region
      $region49: #{tpu_custom_call.1} parent=43 // pred_check
        %p306 = pneg %p75
      $region50: #{tpu_custom_call.1} parent=43 // pred_check_branch
        %308 = sbr.rel (%p306) target = $region52
      $region51: #{tpu_custom_call.1} parent=43 // pred_region
        %p309 = scmp.lt.s32.totalorder %s22, 1
        %s310 = scalar_select %p309, %s22, 1
        %s311 = smul.addr %s310, 4
        %s312 = smul.addr %s311, 8
        %s313 = scalar_lea.vmem %s1, %s312
      $region52: #{tpu_custom_call.1} parent=43 // pred_fallthru
        _
    $region44: #{tpu_custom_call.1} parent=5 // pred_fallthru
      _
    %p314 = scmp.le.s32.totalorder 1, %s15
    %p315 = scmp.lt.s32.totalorder %s15, 3
    %p316 = pnand %p314, %p315
    %p317 = pneg %p316
    // Predicated region
    $region53: #{tpu_custom_call.1} parent=5 // pred_check
      _
    $region54: #{tpu_custom_call.1} parent=5 // pred_check_branch
      %319 = sbr.rel (%p316) target = $region56
    $region55: #{tpu_custom_call.1} parent=5 // pred_region
      %s320 = ssub.s32 %s15, 1
      %p321 = scmp.lt.s32.totalorder %s24, 1
      %s322 = scalar_select %p321, %s24, 1
      %p323 = scmp.lt.s32.totalorder %s25, 0
      %s324 = scalar_select %p323, %s25, 0
      %s325 = sadd.s32 %s324, %s322
      %s326 = smul.addr %s325, 4
      %s327 = scalar_lea.vmem %s0, %s326
      %p328 = pneg %p55
      %p329 = pneg %p52
      %p330 = scmp.lt.s32.totalorder %s24, 1
      %s331 = scalar_select %p330, %s24, 1
      %s332 = smul.addr %s331, 4
      %s333 = smul.addr %s332, 8
      %s334 = scalar_lea.vmem %s1, %s333
      %p335 = pneg %p81
      %p336 = pneg %p78
      %p337 = pneg %p102
      %p338 = pneg %p99
      %p339 = pneg %p123
      %p340 = pneg %p120
      %p341 = pneg %p144
      %p342 = pneg %p141
      %p343 = pneg %p165
      %p344 = pneg %p162
      %p345 = pneg %p186
      %p346 = pneg %p183
      %p347 = pneg %p207
      %p348 = pneg %p204
      %p349 = pneg %p228
      %p350 = pneg %p225
      %p351 = pneg %p256
      %p352 = pneg %p253
      %p353 = scmp.lt.s32.totalorder %s24, 1
      %s354 = scalar_select %p353, %s24, 1
      %p355 = scmp.lt.s32.totalorder %s25, 0
      %s356 = scalar_select %p355, %s25, 0
      %s357 = sadd.s32 %s356, %s354
      %s358 = smul.addr %s357, 4
      %s359 = scalar_lea.vmem %s9, %s358
      %p360 = scmp.lt.s32.totalorder %s24, 1
      %s361 = scalar_select %p360, %s24, 1
      %p362 = scmp.lt.s32.totalorder %s25, 0
      %s363 = scalar_select %p362, %s25, 0
      %s364 = sadd.s32 %s363, %s361
      %s365 = smul.addr %s364, 4
      %s366 = scalar_lea.vmem %s0, %s365
      %p367 = scmp.lt.s32.totalorder %s24, 1
      %s368 = scalar_select %p367, %s24, 1
      %s369 = smul.addr %s368, 4
      %s370 = smul.addr %s369, 8
      %s371 = scalar_lea.vmem %s1, %s370
      %p372 = scmp.lt.s32.totalorder %s24, 1
      %s373 = scalar_select %p372, %s24, 1
      %p374 = scmp.lt.s32.totalorder %s25, 0
      %s375 = scalar_select %p374, %s25, 0
      %s376 = sadd.s32 %s375, %s373
      %s377 = smul.addr %s376, 4
      %s378 = scalar_lea.vmem %s9, %s377
      %v379 = vld [vmem:[%s366] sm:$0x7]
      %v380 = vld [vmem:[%s2] sm:$0xff]
      %v381 = vld [vmem:[%s2 + $0x8] sm:$0xff]
      %v382 = vld [vmem:[%s2 + $0x10] sm:$0xff]
      %v383 = vld [vmem:[%s2 + $0x18] sm:$0xff]
      %385 = vset.pattern.permute.xlu0 0
      %386 = vperm.xlu0 %385, %v380
      %v387 = vpop.permute.xlu0 %386
      %390 = vset.pattern.permute.xlu0 0
      %391 = vperm.xlu0 %390, %v381
      %v392 = vpop.permute.xlu0 %391
      %395 = vset.pattern.permute.xlu0 0
      %396 = vperm.xlu0 %395, %v382
      %v397 = vpop.permute.xlu0 %396
      %400 = vset.pattern.permute.xlu0 0
      %401 = vperm.xlu0 %400, %v383
      %v402 = vpop.permute.xlu0 %401
      %v404 = vlaneseq
      %v405 = vshrl.u32 %v404, 7
      %v406 = vsub.s32 0, %v405
      %v407 = vrot.slane %v379, %v406
      %v408 = vmul.f32 %v387, %v407
      %v409 = vmul.f32 %v392, %v407
      %v410 = vmul.f32 %v397, %v407
      %v411 = vmul.f32 %v402, %v407
      %s412 = scalar_lea.vmem %s2, 32
      %v413 = vld [vmem:[%s412] sm:$0xff]
      %v414 = vld [vmem:[%s412 + $0x8] sm:$0xff]
      %v415 = vld [vmem:[%s412 + $0x10] sm:$0xff]
      %v416 = vld [vmem:[%s412 + $0x18] sm:$0xff]
      %418 = vset.pattern.permute.xlu0 0
      %419 = vperm.xlu0 %418, %v413
      %v420 = vpop.permute.xlu0 %419
      %423 = vset.pattern.permute.xlu0 0
      %424 = vperm.xlu0 %423, %v414
      %v425 = vpop.permute.xlu0 %424
      %428 = vset.pattern.permute.xlu0 0
      %429 = vperm.xlu0 %428, %v415
      %v430 = vpop.permute.xlu0 %429
      %433 = vset.pattern.permute.xlu0 0
      %434 = vperm.xlu0 %433, %v416
      %v435 = vpop.permute.xlu0 %434
      %v437 = vlaneseq
      %v438 = vshrl.u32 %v437, 7
      %v439 = vsub.s32 1, %v438
      %v440 = vrot.slane %v379, %v439
      %v441 = vmul.f32 %v420, %v440
      %v442 = vmul.f32 %v425, %v440
      %v443 = vmul.f32 %v430, %v440
      %v444 = vmul.f32 %v435, %v440
      %v445 = vadd.f32 %v408, %v441
      %v446 = vadd.f32 %v409, %v442
      %v447 = vadd.f32 %v410, %v443
      %v448 = vadd.f32 %v411, %v444
      %s449 = scalar_lea.vmem %s2, 64
      %v450 = vld [vmem:[%s449] sm:$0xff]
      %v451 = vld [vmem:[%s449 + $0x8] sm:$0xff]
      %v452 = vld [vmem:[%s449 + $0x10] sm:$0xff]
      %v453 = vld [vmem:[%s449 + $0x18] sm:$0xff]
      %455 = vset.pattern.permute.xlu0 0
      %456 = vperm.xlu0 %455, %v450
      %v457 = vpop.permute.xlu0 %456
      %460 = vset.pattern.permute.xlu0 0
      %461 = vperm.xlu0 %460, %v451
      %v462 = vpop.permute.xlu0 %461
      %465 = vset.pattern.permute.xlu0 0
      %466 = vperm.xlu0 %465, %v452
      %v467 = vpop.permute.xlu0 %466
      %470 = vset.pattern.permute.xlu0 0
      %471 = vperm.xlu0 %470, %v453
      %v472 = vpop.permute.xlu0 %471
      %v474 = vlaneseq
      %v475 = vshrl.u32 %v474, 7
      %v476 = vsub.s32 2, %v475
      %v477 = vrot.slane %v379, %v476
      %v478 = vmul.f32 %v457, %v477
      %v479 = vmul.f32 %v462, %v477
      %v480 = vmul.f32 %v467, %v477
      %v481 = vmul.f32 %v472, %v477
      %v482 = vadd.f32 %v445, %v478
      %v483 = vadd.f32 %v446, %v479
      %v484 = vadd.f32 %v447, %v480
      %v485 = vadd.f32 %v448, %v481
      %v486 = vld [vmem:[%s371] sm:$0xff]
      %v487 = vld [vmem:[%s371 + $0x8] sm:$0xff]
      %v488 = vld [vmem:[%s371 + $0x10] sm:$0xff]
      %v489 = vld [vmem:[%s371 + $0x18] sm:$0xff]
      %491 = vset.pattern.permute.xlu0 0
      %492 = vperm.xlu0 %491, %v486
      %v493 = vpop.permute.xlu0 %492
      %496 = vset.pattern.permute.xlu0 0
      %497 = vperm.xlu0 %496, %v487
      %v498 = vpop.permute.xlu0 %497
      %501 = vset.pattern.permute.xlu0 0
      %502 = vperm.xlu0 %501, %v488
      %v503 = vpop.permute.xlu0 %502
      %506 = vset.pattern.permute.xlu0 0
      %507 = vperm.xlu0 %506, %v489
      %v508 = vpop.permute.xlu0 %507
      %v510 = vadd.f32 %v482, %v493
      %v511 = vadd.f32 %v483, %v498
      %v512 = vadd.f32 %v484, %v503
      %v513 = vadd.f32 %v485, %v508
      %v514 = vmax.f32 %v510, 0.0
      %v515 = vmax.f32 %v511, 0.0
      %v516 = vmax.f32 %v512, 0.0
      %v517 = vmax.f32 %v513, 0.0
      %v518 = vld [vmem:[%s3] sm:$0xff]
      %v519 = vld [vmem:[%s3 + $0x8] sm:$0xff]
      %v520 = vld [vmem:[%s3 + $0x10] sm:$0xff]
      %v521 = vld [vmem:[%s3 + $0x18] sm:$0xff]
      %v522 = vld [vmem:[%s4] sm:$0xff]
      %v523 = vld [vmem:[%s4 + $0x8] sm:$0xff]
      %v524 = vld [vmem:[%s4 + $0x10] sm:$0xff]
      %v525 = vld [vmem:[%s4 + $0x18] sm:$0xff]
      %527 = vset.pattern.permute.xlu0 0
      %528 = vperm.xlu0 %527, %v522
      %v529 = vpop.permute.xlu0 %528
      %532 = vset.pattern.permute.xlu0 0
      %533 = vperm.xlu0 %532, %v523
      %v534 = vpop.permute.xlu0 %533
      %537 = vset.pattern.permute.xlu0 0
      %538 = vperm.xlu0 %537, %v524
      %v539 = vpop.permute.xlu0 %538
      %542 = vset.pattern.permute.xlu0 0
      %543 = vperm.xlu0 %542, %v525
      %v544 = vpop.permute.xlu0 %543
      %vm546 = vcmask 261120
      %v548 = vsel %vm546, %v518, 0
      %v551 = vsel %vm546, %v519, 0
      %v554 = vsel %vm546, %v520, 0
      %v557 = vsel %vm546, %v521, 0
      %559 = vmatprep.subr.mxu0 0.0
      %560 = vmatpush1.msra.mxu0 %v514
      %561 = vmatprep.subr.mxu0 0.0
      %562 = vmatpush1.msra.mxu0 %v515
      %563 = vmatprep.subr.mxu0 0.0
      %564 = vmatpush1.msra.mxu0 %v516
      %565 = vmatprep.subr.mxu0 0.0
      %566 = vmatpush1.msra.mxu0 %v517
      %567 = vmatprep.subr.mxu0 0.0
      %568 = vmatpush1.msra.mxu0 0.0
      %569 = vmatprep.subr.mxu0 0.0
      %570 = vmatpush1.msra.mxu0 0.0
      %571 = vmatprep.subr.mxu0 0.0
      %572 = vmatpush1.msra.mxu0 0.0
      %573 = vmatprep.subr.mxu0 0.0
      %574 = vmatpush1.msra.mxu0 0.0
      %575 = vmatprep.subr.mxu0 0.0
      %576 = vmatpush1.msra.mxu0 0.0
      %577 = vmatprep.subr.mxu0 0.0
      %578 = vmatpush1.msra.mxu0 0.0
      %579 = vmatprep.subr.mxu0 0.0
      %580 = vmatpush1.msra.mxu0 0.0
      %581 = vmatprep.subr.mxu0 0.0
      %582 = vmatpush1.msra.mxu0 0.0
      %583 = vmatprep.subr.mxu0 0.0
      %584 = vmatpush1.msra.mxu0 0.0
      %585 = vmatprep.subr.mxu0 0.0
      %586 = vmatpush1.msra.mxu0 0.0
      %587 = vmatprep.subr.mxu0 0.0
      %588 = vmatpush1.msra.mxu0 0.0
      %589 = vmatprep.subr.mxu0 0.0
      %590 = vmatpush1.msra.mxu0 0.0
      %591 = vmatprep.subr.mxu0 0.0
      %592 = vmatpush1.msra.mxu0 0.0
      %593 = vmatprep.subr.mxu0 0.0
      %594 = vmatpush1.msra.mxu0 0.0
      %595 = vmatprep.subr.mxu0 0.0
      %596 = vmatpush1.msra.mxu0 0.0
      %597 = vmatprep.subr.mxu0 0.0
      %598 = vmatpush1.msra.mxu0 0.0
      %599 = vmatprep.subr.mxu0 0.0
      %600 = vmatpush1.msra.mxu0 0.0
      %601 = vmatprep.subr.mxu0 0.0
      %602 = vmatpush1.msra.mxu0 0.0
      %603 = vmatprep.subr.mxu0 0.0
      %604 = vmatpush1.msra.mxu0 0.0
      %605 = vmatprep.subr.mxu0 0.0
      %606 = vmatpush1.msra.mxu0 0.0
      %607 = vmatprep.subr.mxu0 0.0
      %608 = vmatpush1.msra.mxu0 0.0
      %609 = vmatprep.subr.mxu0 0.0
      %610 = vmatpush1.msra.mxu0 0.0
      %611 = vmatprep.subr.mxu0 0.0
      %612 = vmatpush1.msra.mxu0 0.0
      %613 = vmatprep.subr.mxu0 0.0
      %614 = vmatpush1.msra.mxu0 0.0
      %615 = vmatprep.subr.mxu0 0.0
      %616 = vmatpush1.msra.mxu0 0.0
      %617 = vmatprep.subr.mxu0 0.0
      %618 = vmatpush1.msra.mxu0 0.0
      %619 = vmatprep.subr.mxu0 0.0
      %620 = vmatpush1.msra.mxu0 0.0
      %621 = vmatprep.subr.mxu0 0.0
      %622 = vmatpush1.msra.mxu0 0.0
      %623 = vmatprep.mubr.f32.mxu0 0.0
      %624 = vmatmul.mubr.f32.gmra.mrb[0].mxu0 %v548
      %v625 = vpop.f32.mrb[0].mxu0
      %v626 = vadd.f32 %v529, %v625
      %v627 = vpop.f32.mrb[0].mxu0
      %628 = vmatprep.mubr.f32.mxu0 0.0
      %629 = vmatmul.mubr.f32.gmra.mrb[0].mxu0 %v551
      %v630 = vpop.f32.mrb[0].mxu0
      %v631 = vadd.f32 %v534, %v630
      %v632 = vpop.f32.mrb[0].mxu0
      %633 = vmatprep.mubr.f32.mxu0 0.0
      %634 = vmatmul.mubr.f32.gmra.mrb[0].mxu0 %v554
      %v635 = vpop.f32.mrb[0].mxu0
      %v636 = vadd.f32 %v539, %v635
      %v637 = vpop.f32.mrb[0].mxu0
      %638 = vmatprep.mubr.f32.mxu0 0.0
      %639 = vmatmul.mubr.f32.gmra.mrb[0].mxu0 %v557
      %v640 = vpop.f32.mrb[0].mxu0
      %v641 = vadd.f32 %v544, %v640
      %v642 = vpop.f32.mrb[0].mxu0
      %643 = vdwg.mxu0
      %v644 = vmax.f32 %v626, 0.0
      %v645 = vmax.f32 %v631, 0.0
      %v646 = vmax.f32 %v636, 0.0
      %v647 = vmax.f32 %v641, 0.0
      %v648 = vld [vmem:[%s5] sm:$0xff]
      %v649 = vld [vmem:[%s5 + $0x8] sm:$0xff]
      %v650 = vld [vmem:[%s5 + $0x10] sm:$0xff]
      %v651 = vld [vmem:[%s5 + $0x18] sm:$0xff]
      %v652 = vld [vmem:[%s6] sm:$0xff]
      %v653 = vld [vmem:[%s6 + $0x8] sm:$0xff]
      %v654 = vld [vmem:[%s6 + $0x10] sm:$0xff]
      %v655 = vld [vmem:[%s6 + $0x18] sm:$0xff]
      %657 = vset.pattern.permute.xlu0 0
      %658 = vperm.xlu0 %657, %v652
      %v659 = vpop.permute.xlu0 %658
      %662 = vset.pattern.permute.xlu0 0
      %663 = vperm.xlu0 %662, %v653
      %v664 = vpop.permute.xlu0 %663
      %667 = vset.pattern.permute.xlu0 0
      %668 = vperm.xlu0 %667, %v654
      %v669 = vpop.permute.xlu0 %668
      %672 = vset.pattern.permute.xlu0 0
      %673 = vperm.xlu0 %672, %v655
      %v674 = vpop.permute.xlu0 %673
      %v677 = vsel %vm546, %v648, 0
      %v680 = vsel %vm546, %v649, 0
      %v683 = vsel %vm546, %v650, 0
      %v686 = vsel %vm546, %v651, 0
      %688 = vmatprep.subr.mxu0 0.0
      %689 = vmatpush1.msra.mxu0 %v644
      %690 = vmatprep.subr.mxu0 0.0
      %691 = vmatpush1.msra.mxu0 %v645
      %692 = vmatprep.subr.mxu0 0.0
      %693 = vmatpush1.msra.mxu0 %v646
      %694 = vmatprep.subr.mxu0 0.0
      %695 = vmatpush1.msra.mxu0 %v647
      %696 = vmatprep.subr.mxu0 0.0
      %697 = vmatpush1.msra.mxu0 0.0
      %698 = vmatprep.subr.mxu0 0.0
      %699 = vmatpush1.msra.mxu0 0.0
      %700 = vmatprep.subr.mxu0 0.0
      %701 = vmatpush1.msra.mxu0 0.0
      %702 = vmatprep.subr.mxu0 0.0
      %703 = vmatpush1.msra.mxu0 0.0
      %704 = vmatprep.subr.mxu0 0.0
      %705 = vmatpush1.msra.mxu0 0.0
      %706 = vmatprep.subr.mxu0 0.0
      %707 = vmatpush1.msra.mxu0 0.0
      %708 = vmatprep.subr.mxu0 0.0
      %709 = vmatpush1.msra.mxu0 0.0
      %710 = vmatprep.subr.mxu0 0.0
      %711 = vmatpush1.msra.mxu0 0.0
      %712 = vmatprep.subr.mxu0 0.0
      %713 = vmatpush1.msra.mxu0 0.0
      %714 = vmatprep.subr.mxu0 0.0
      %715 = vmatpush1.msra.mxu0 0.0
      %716 = vmatprep.subr.mxu0 0.0
      %717 = vmatpush1.msra.mxu0 0.0
      %718 = vmatprep.subr.mxu0 0.0
      %719 = vmatpush1.msra.mxu0 0.0
      %720 = vmatprep.subr.mxu0 0.0
      %721 = vmatpush1.msra.mxu0 0.0
      %722 = vmatprep.subr.mxu0 0.0
      %723 = vmatpush1.msra.mxu0 0.0
      %724 = vmatprep.subr.mxu0 0.0
      %725 = vmatpush1.msra.mxu0 0.0
      %726 = vmatprep.subr.mxu0 0.0
      %727 = vmatpush1.msra.mxu0 0.0
      %728 = vmatprep.subr.mxu0 0.0
      %729 = vmatpush1.msra.mxu0 0.0
      %730 = vmatprep.subr.mxu0 0.0
      %731 = vmatpush1.msra.mxu0 0.0
      %732 = vmatprep.subr.mxu0 0.0
      %733 = vmatpush1.msra.mxu0 0.0
      %734 = vmatprep.subr.mxu0 0.0
      %735 = vmatpush1.msra.mxu0 0.0
      %736 = vmatprep.subr.mxu0 0.0
      %737 = vmatpush1.msra.mxu0 0.0
      %738 = vmatprep.subr.mxu0 0.0
      %739 = vmatpush1.msra.mxu0 0.0
      %740 = vmatprep.subr.mxu0 0.0
      %741 = vmatpush1.msra.mxu0 0.0
      %742 = vmatprep.subr.mxu0 0.0
      %743 = vmatpush1.msra.mxu0 0.0
      %744 = vmatprep.subr.mxu0 0.0
      %745 = vmatpush1.msra.mxu0 0.0
      %746 = vmatprep.subr.mxu0 0.0
      %747 = vmatpush1.msra.mxu0 0.0
      %748 = vmatprep.subr.mxu0 0.0
      %749 = vmatpush1.msra.mxu0 0.0
      %750 = vmatprep.subr.mxu0 0.0
      %751 = vmatpush1.msra.mxu0 0.0
      %752 = vmatprep.mubr.f32.mxu0 0.0
      %753 = vmatmul.mubr.f32.gmra.mrb[0].mxu0 %v677
      %v754 = vpop.f32.mrb[0].mxu0
      %v755 = vadd.f32 %v659, %v754
      %v756 = vpop.f32.mrb[0].mxu0
      %757 = vmatprep.mubr.f32.mxu0 0.0
      %758 = vmatmul.mubr.f32.gmra.mrb[0].mxu0 %v680
      %v759 = vpop.f32.mrb[0].mxu0
      %v760 = vadd.f32 %v664, %v759
      %v761 = vpop.f32.mrb[0].mxu0
      %762 = vmatprep.mubr.f32.mxu0 0.0
      %763 = vmatmul.mubr.f32.gmra.mrb[0].mxu0 %v683
      %v764 = vpop.f32.mrb[0].mxu0
      %v765 = vadd.f32 %v669, %v764
      %v766 = vpop.f32.mrb[0].mxu0
      %767 = vmatprep.mubr.f32.mxu0 0.0
      %768 = vmatmul.mubr.f32.gmra.mrb[0].mxu0 %v686
      %v769 = vpop.f32.mrb[0].mxu0
      %v770 = vadd.f32 %v674, %v769
      %v771 = vpop.f32.mrb[0].mxu0
      %772 = vdwg.mxu0
      %v773 = vmax.f32 %v755, 0.0
      %v774 = vmax.f32 %v760, 0.0
      %v775 = vmax.f32 %v765, 0.0
      %v776 = vmax.f32 %v770, 0.0
      %s777 = scalar_lea.vmem %s5, 32
      %v778 = vld [vmem:[%s777] sm:$0xff]
      %v779 = vld [vmem:[%s777 + $0x8] sm:$0xff]
      %v780 = vld [vmem:[%s777 + $0x10] sm:$0xff]
      %v781 = vld [vmem:[%s777 + $0x18] sm:$0xff]
      %s782 = scalar_lea.vmem %s6, 32
      %v783 = vld [vmem:[%s782] sm:$0xff]
      %v784 = vld [vmem:[%s782 + $0x8] sm:$0xff]
      %v785 = vld [vmem:[%s782 + $0x10] sm:$0xff]
      %v786 = vld [vmem:[%s782 + $0x18] sm:$0xff]
      %788 = vset.pattern.permute.xlu0 0
      %789 = vperm.xlu0 %788, %v783
      %v790 = vpop.permute.xlu0 %789
      %793 = vset.pattern.permute.xlu0 0
      %794 = vperm.xlu0 %793, %v784
      %v795 = vpop.permute.xlu0 %794
      %798 = vset.pattern.permute.xlu0 0
      %799 = vperm.xlu0 %798, %v785
      %v800 = vpop.permute.xlu0 %799
      %803 = vset.pattern.permute.xlu0 0
      %804 = vperm.xlu0 %803, %v786
      %v805 = vpop.permute.xlu0 %804
      %v808 = vsel %vm546, %v778, 0
      %v811 = vsel %vm546, %v779, 0
      %v814 = vsel %vm546, %v780, 0
      %v817 = vsel %vm546, %v781, 0
      %819 = vmatprep.subr.mxu0 0.0
      %820 = vmatpush1.msra.mxu0 %v773
      %821 = vmatprep.subr.mxu0 0.0
      %822 = vmatpush1.msra.mxu0 %v774
      %823 = vmatprep.subr.mxu0 0.0
      %824 = vmatpush1.msra.mxu0 %v775
      %825 = vmatprep.subr.mxu0 0.0
      %826 = vmatpush1.msra.mxu0 %v776
      %827 = vmatprep.subr.mxu0 0.0
      %828 = vmatpush1.msra.mxu0 0.0
      %829 = vmatprep.subr.mxu0 0.0
      %830 = vmatpush1.msra.mxu0 0.0
      %831 = vmatprep.subr.mxu0 0.0
      %832 = vmatpush1.msra.mxu0 0.0
      %833 = vmatprep.subr.mxu0 0.0
      %834 = vmatpush1.msra.mxu0 0.0
      %835 = vmatprep.subr.mxu0 0.0
      %836 = vmatpush1.msra.mxu0 0.0
      %837 = vmatprep.subr.mxu0 0.0
      %838 = vmatpush1.msra.mxu0 0.0
      %839 = vmatprep.subr.mxu0 0.0
      %840 = vmatpush1.msra.mxu0 0.0
      %841 = vmatprep.subr.mxu0 0.0
      %842 = vmatpush1.msra.mxu0 0.0
      %843 = vmatprep.subr.mxu0 0.0
      %844 = vmatpush1.msra.mxu0 0.0
      %845 = vmatprep.subr.mxu0 0.0
      %846 = vmatpush1.msra.mxu0 0.0
      %847 = vmatprep.subr.mxu0 0.0
      %848 = vmatpush1.msra.mxu0 0.0
      %849 = vmatprep.subr.mxu0 0.0
      %850 = vmatpush1.msra.mxu0 0.0
      %851 = vmatprep.subr.mxu0 0.0
      %852 = vmatpush1.msra.mxu0 0.0
      %853 = vmatprep.subr.mxu0 0.0
      %854 = vmatpush1.msra.mxu0 0.0
      %855 = vmatprep.subr.mxu0 0.0
      %856 = vmatpush1.msra.mxu0 0.0
      %857 = vmatprep.subr.mxu0 0.0
      %858 = vmatpush1.msra.mxu0 0.0
      %859 = vmatprep.subr.mxu0 0.0
      %860 = vmatpush1.msra.mxu0 0.0
      %861 = vmatprep.subr.mxu0 0.0
      %862 = vmatpush1.msra.mxu0 0.0
      %863 = vmatprep.subr.mxu0 0.0
      %864 = vmatpush1.msra.mxu0 0.0
      %865 = vmatprep.subr.mxu0 0.0
      %866 = vmatpush1.msra.mxu0 0.0
      %867 = vmatprep.subr.mxu0 0.0
      %868 = vmatpush1.msra.mxu0 0.0
      %869 = vmatprep.subr.mxu0 0.0
      %870 = vmatpush1.msra.mxu0 0.0
      %871 = vmatprep.subr.mxu0 0.0
      %872 = vmatpush1.msra.mxu0 0.0
      %873 = vmatprep.subr.mxu0 0.0
      %874 = vmatpush1.msra.mxu0 0.0
      %875 = vmatprep.subr.mxu0 0.0
      %876 = vmatpush1.msra.mxu0 0.0
      %877 = vmatprep.subr.mxu0 0.0
      %878 = vmatpush1.msra.mxu0 0.0
      %879 = vmatprep.subr.mxu0 0.0
      %880 = vmatpush1.msra.mxu0 0.0
      %881 = vmatprep.subr.mxu0 0.0
      %882 = vmatpush1.msra.mxu0 0.0
      %883 = vmatprep.mubr.f32.mxu0 0.0
      %884 = vmatmul.mubr.f32.gmra.mrb[0].mxu0 %v808
      %v885 = vpop.f32.mrb[0].mxu0
      %v886 = vadd.f32 %v790, %v885
      %v887 = vpop.f32.mrb[0].mxu0
      %888 = vmatprep.mubr.f32.mxu0 0.0
      %889 = vmatmul.mubr.f32.gmra.mrb[0].mxu0 %v811
      %v890 = vpop.f32.mrb[0].mxu0
      %v891 = vadd.f32 %v795, %v890
      %v892 = vpop.f32.mrb[0].mxu0
      %893 = vmatprep.mubr.f32.mxu0 0.0
      %894 = vmatmul.mubr.f32.gmra.mrb[0].mxu0 %v814
      %v895 = vpop.f32.mrb[0].mxu0
      %v896 = vadd.f32 %v800, %v895
      %v897 = vpop.f32.mrb[0].mxu0
      %898 = vmatprep.mubr.f32.mxu0 0.0
      %899 = vmatmul.mubr.f32.gmra.mrb[0].mxu0 %v817
      %v900 = vpop.f32.mrb[0].mxu0
      %v901 = vadd.f32 %v805, %v900
      %v902 = vpop.f32.mrb[0].mxu0
      %903 = vdwg.mxu0
      %v904 = vmax.f32 %v886, 0.0
      %v905 = vmax.f32 %v891, 0.0
      %v906 = vmax.f32 %v896, 0.0
      %v907 = vmax.f32 %v901, 0.0
      %v908 = vld [vmem:[%s7] sm:$0x7]
      %v909 = vld [vmem:[%s8] sm:$0x7]
      %911 = vset.pattern.permute.xlu0 0
      %912 = vperm.xlu0 %911, %v909
      %v913 = vpop.permute.xlu0 %912
      %v916 = vsel %vm546, %v908, 0
      %918 = vmatprep.subr.mxu0 0.0
      %919 = vmatpush1.msra.mxu0 %v904
      %920 = vmatprep.subr.mxu0 0.0
      %921 = vmatpush1.msra.mxu0 %v905
      %922 = vmatprep.subr.mxu0 0.0
      %923 = vmatpush1.msra.mxu0 %v906
      %924 = vmatprep.subr.mxu0 0.0
      %925 = vmatpush1.msra.mxu0 %v907
      %926 = vmatprep.subr.mxu0 0.0
      %927 = vmatpush1.msra.mxu0 0.0
      %928 = vmatprep.subr.mxu0 0.0
      %929 = vmatpush1.msra.mxu0 0.0
      %930 = vmatprep.subr.mxu0 0.0
      %931 = vmatpush1.msra.mxu0 0.0
      %932 = vmatprep.subr.mxu0 0.0
      %933 = vmatpush1.msra.mxu0 0.0
      %934 = vmatprep.subr.mxu0 0.0
      %935 = vmatpush1.msra.mxu0 0.0
      %936 = vmatprep.subr.mxu0 0.0
      %937 = vmatpush1.msra.mxu0 0.0
      %938 = vmatprep.subr.mxu0 0.0
      %939 = vmatpush1.msra.mxu0 0.0
      %940 = vmatprep.subr.mxu0 0.0
      %941 = vmatpush1.msra.mxu0 0.0
      %942 = vmatprep.subr.mxu0 0.0
      %943 = vmatpush1.msra.mxu0 0.0
      %944 = vmatprep.subr.mxu0 0.0
      %945 = vmatpush1.msra.mxu0 0.0
      %946 = vmatprep.subr.mxu0 0.0
      %947 = vmatpush1.msra.mxu0 0.0
      %948 = vmatprep.subr.mxu0 0.0
      %949 = vmatpush1.msra.mxu0 0.0
      %950 = vmatprep.subr.mxu0 0.0
      %951 = vmatpush1.msra.mxu0 0.0
      %952 = vmatprep.subr.mxu0 0.0
      %953 = vmatpush1.msra.mxu0 0.0
      %954 = vmatprep.subr.mxu0 0.0
      %955 = vmatpush1.msra.mxu0 0.0
      %956 = vmatprep.subr.mxu0 0.0
      %957 = vmatpush1.msra.mxu0 0.0
      %958 = vmatprep.subr.mxu0 0.0
      %959 = vmatpush1.msra.mxu0 0.0
      %960 = vmatprep.subr.mxu0 0.0
      %961 = vmatpush1.msra.mxu0 0.0
      %962 = vmatprep.subr.mxu0 0.0
      %963 = vmatpush1.msra.mxu0 0.0
      %964 = vmatprep.subr.mxu0 0.0
      %965 = vmatpush1.msra.mxu0 0.0
      %966 = vmatprep.subr.mxu0 0.0
      %967 = vmatpush1.msra.mxu0 0.0
      %968 = vmatprep.subr.mxu0 0.0
      %969 = vmatpush1.msra.mxu0 0.0
      %970 = vmatprep.subr.mxu0 0.0
      %971 = vmatpush1.msra.mxu0 0.0
      %972 = vmatprep.subr.mxu0 0.0
      %973 = vmatpush1.msra.mxu0 0.0
      %974 = vmatprep.subr.mxu0 0.0
      %975 = vmatpush1.msra.mxu0 0.0
      %976 = vmatprep.subr.mxu0 0.0
      %977 = vmatpush1.msra.mxu0 0.0
      %978 = vmatprep.subr.mxu0 0.0
      %979 = vmatpush1.msra.mxu0 0.0
      %980 = vmatprep.subr.mxu0 0.0
      %981 = vmatpush1.msra.mxu0 0.0
      %982 = vmatprep.mubr.f32.mxu0 0.0
      %983 = vmatmul.mubr.f32.gmra.mrb[0].mxu0 %v916
      %v984 = vpop.f32.mrb[0].mxu0
      %v985 = vadd.f32 %v913, %v984
      %v986 = vpop.f32.mrb[0].mxu0
      %987 = vdwg.mxu0
      %988 = vst [vmem:[%s378] sm:$0x7] %v985
      %p989 = scmp.lt.s32.totalorder %s24, 1
      %s990 = scalar_select %p989, %s24, 1
      %p991 = scmp.lt.s32.totalorder %s25, 0
      %s992 = scalar_select %p991, %s25, 0
      %s993 = sadd.s32 %s992, %s990
      %s994 = smul.addr %s993, 4
      %s995 = scalar_lea.vmem %s9, %s994
      // Predicated region
      $region57: #{tpu_custom_call.1} parent=55 // pred_check
        %p996 = pneg %p253
      $region58: #{tpu_custom_call.1} parent=55 // pred_check_branch
        %998 = sbr.rel (%p996) target = $region60
      $region59: #{tpu_custom_call.1} parent=55 // pred_region
        _
      $region60: #{tpu_custom_call.1} parent=55 // pred_fallthru
        _
    $region56: #{tpu_custom_call.1} parent=5 // pred_fallthru
      _
    %p999 = scmp.le.s32.totalorder 2, %s15
    // Predicated region
    $region61: #{tpu_custom_call.1} parent=5 // pred_check
      %p1000 = pneg %p999
    $region62: #{tpu_custom_call.1} parent=5 // pred_check_branch
      %1002 = sbr.rel (%p1000) target = $region64
    $region63: #{tpu_custom_call.1} parent=5 // pred_region
      %s1003 = ssub.s32 %s15, 2
      // Predicated region
      $region65: #{tpu_custom_call.1} parent=63 // pred_check
        %p1004 = pneg %p259
      $region66: #{tpu_custom_call.1} parent=63 // pred_check_branch
        %1006 = sbr.rel (%p1004) target = $region68
      $region67: #{tpu_custom_call.1} parent=63 // pred_region
        %p1007 = scmp.lt.s32.totalorder %s26, 1
        %s1008 = scalar_select %p1007, %s26, 1
        %p1009 = scmp.lt.s32.totalorder %s27, 0
        %s1010 = scalar_select %p1009, %s27, 0
        %s1011 = sadd.s32 %s1010, %s1008
        %s1012 = smul.addr %s1011, 4
        %s1013 = scalar_lea.vmem %s9, %s1012
      $region68: #{tpu_custom_call.1} parent=63 // pred_fallthru
        _
    $region64: #{tpu_custom_call.1} parent=5 // pred_fallthru
      _
  $region6: #{tpu_custom_call.1} parent=0 // loop_footer
    %s19 = sadd.s32 1, %s15
  $region7: #{tpu_custom_call.1} parent=0 // loop_footer_branch
    %14 = sbr.rel target = $region3
  $region8: #{tpu_custom_call.1} parent=0 // loop_exit
    _

</llo_original>
